<compile_context>
chip_gen: v7x
topology: tpu7x:2x2x1
jax: 0.10.0
libtpu: 0.0.40
codegen_flags: <defaults>
</compile_context>

<pallas_src>
import math

import jax
import jax.numpy as jnp
from jax.experimental import pallas as pl
from jax.experimental.pallas import tpu as pltpu


def _affine_kernel(x_ref, w_ref, b_ref, o_ref):
    # x_ref: (TILE_ROWS, TILE_COLS); w_ref/b_ref: (1, TILE_COLS) -> broadcast over rows.
    o_ref[...] = (x_ref[...] * w_ref[...] + b_ref[...]).astype(o_ref.dtype)


def _sublane_min(dtype):
    itemsize = jnp.dtype(dtype).itemsize
    if itemsize >= 4:
        return 8
    if itemsize == 2:
        return 16
    return 32


def _round_up(v, m):
    return ((v + m - 1) // m) * m


def affine(x, weight, bias, *, block_bytes=8 << 20, vmem_limit_bytes=48 << 20):
    """Applies x * weight + bias where weight/bias broadcast over the last dim.

    x: (..., dim)   weight, bias: (dim,)
    """
    orig_shape = x.shape
    dim = orig_shape[-1]
    assert weight.shape == (dim,) and bias.shape == (dim,)

    out_dtype = jnp.result_type(x.dtype, weight.dtype, bias.dtype)
    rows = math.prod(orig_shape[:-1]) if len(orig_shape) > 1 else 1

    # ---- Lane-dense folding: if dim is not a multiple of 128, fold k consecutive rows
    # into one row of width k*dim (a multiple of 128) and tile weight/bias k times.
    # Pure row-major reshape; preserves the trailing-dim broadcast exactly. ----
    k = 1
    if dim % 128 != 0:
        k = 128 // math.gcd(dim, 128)
        if rows % k != 0:
            # TODO(synk): peel the largest rows prefix divisible by k through the lane-dense
            # path and handle the < k remainder rows separately; for now fall back to masked
            # (vst.msk) partial stores for this shape (still correct).
            k = 1

    dim_f = dim * k
    rows_f = rows // k

    x2d = x.reshape(rows_f, dim_f)
    # For static module parameters the tile/reshape below is constant-folded under jit;
    # cache the tiled arrays at module init if calling eagerly in a hot loop.
    w2d = (jnp.tile(weight, k) if k > 1 else weight).reshape(1, dim_f)
    b2d = (jnp.tile(bias, k) if k > 1 else bias).reshape(1, dim_f)

    in_itemsize = jnp.dtype(x.dtype).itemsize
    out_itemsize = jnp.dtype(out_dtype).itemsize
    # Budget per buffer on the larger of in/out itemsize so mixed-dtype cases stay in VMEM.
    budget_itemsize = max(in_itemsize, out_itemsize)
    smin = max(_sublane_min(x.dtype), _sublane_min(out_dtype))
    max_block_elems = max(1, block_bytes // budget_itemsize)

    # ---- Lane (last-dim) tiling: split very wide dims into multiples of 128 so the
    # double buffers (2x in + 2x out) never bust the VMEM budget (critical on 64 MiB v7x). ----
    if dim_f <= 128 or dim_f * smin <= max_block_elems:
        tile_cols = dim_f
    else:
        tile_cols = max(128, ((max_block_elems // smin) // 128) * 128)
        tile_cols = min(tile_cols, dim_f)

    # ---- Sublane (row) tiling: biggest row block inside the per-buffer budget,
    # rounded to the sublane minimum (8 f32 / 16 bf16 / 32 int8-fp8). ----
    max_rows = max(1, max_block_elems // tile_cols)
    if max_rows >= rows_f:
        tile_rows = rows_f  # full extent is always a legal block dim
    else:
        tile_rows = max(smin, (max_rows // smin) * smin)
        tile_rows = min(tile_rows, rows_f)

    grid_rows = pl.cdiv(rows_f, tile_rows)
    grid_cols = pl.cdiv(dim_f, tile_cols)

    # ---- Guarantee >= 2 grid steps so ("parallel","parallel") actually shards the stream
    # across v7x's two TensorCores (no effect on single-TC v5e/v6e). ----
    if grid_rows * grid_cols < 2:
        if rows_f >= 2 * smin:
            tile_rows = min(rows_f, _round_up(pl.cdiv(rows_f, 2), smin))
            grid_rows = pl.cdiv(rows_f, tile_rows)
        elif dim_f >= 256 and dim_f % 128 == 0:
            tile_cols = min(dim_f, _round_up(pl.cdiv(dim_f, 2), 128))
            grid_cols = pl.cdiv(dim_f, tile_cols)

    nbytes = rows * dim * (in_itemsize + out_itemsize)
    cost = pl.CostEstimate(
        flops=2 * rows * dim,
        transcendentals=0,
        bytes_accessed=nbytes + 2 * dim_f * jnp.dtype(weight.dtype).itemsize,
    )

    out2d = pl.pallas_call(
        _affine_kernel,
        out_shape=jax.ShapeDtypeStruct((rows_f, dim_f), out_dtype),
        grid_spec=pltpu.PrefetchScalarGridSpec(
            num_scalar_prefetch=0,
            grid=(grid_rows, grid_cols),
            in_specs=[
                pl.BlockSpec((tile_rows, tile_cols), lambda i, j: (i, j)),
                pl.BlockSpec((1, tile_cols), lambda i, j: (0, j)),
                pl.BlockSpec((1, tile_cols), lambda i, j: (0, j)),
            ],
            out_specs=pl.BlockSpec((tile_rows, tile_cols), lambda i, j: (i, j)),
        ),
        compiler_params=pltpu.CompilerParams(
            dimension_semantics=("parallel", "parallel"),
            vmem_limit_bytes=vmem_limit_bytes,
        ),
        cost_estimate=cost,
    )(x2d, w2d, b2d)

    return out2d.reshape(orig_shape)


if __name__ == "__main__":
    key = jax.random.PRNGKey(0)

    # --- Primary small-shape check matching the module (dim=32 -> lane-dense folding) ---
    batch, seq, dim = 2, 8, 32

    # Deterministic parameter init matching Affine.__init__(dim, alpha_init=1):
    alpha_init = 1.0
    weight = jnp.full((dim,), alpha_init, dtype=jnp.float32)   # weight.fill_(alpha_init)
    bias = jnp.zeros((dim,), dtype=jnp.float32)                # bias = zeros(dim)

    x = jax.random.normal(key, (batch, seq, dim), dtype=jnp.float32)

    out = affine(x, weight, bias)
    out = jax.block_until_ready(out)

    ref = x * weight + bias
    assert out.shape == ref.shape
    assert jnp.allclose(out, ref, atol=1e-6, rtol=1e-6)

    # --- Secondary check: non-trivial weight/bias.  Default block size exercises the
    #     ">=2 grid steps" cap; the small-block call exercises a ragged trailing row block. ---
    k1, k2, k3 = jax.random.split(jax.random.PRNGKey(1), 3)
    dim2 = 128
    x2 = jax.random.normal(k1, (4, 100, dim2), dtype=jnp.float32)   # rows=400
    w2 = jax.random.normal(k2, (dim2,), dtype=jnp.float32)
    b2 = jax.random.normal(k3, (dim2,), dtype=jnp.float32)
    ref2 = x2 * w2 + b2
    out2a = jax.block_until_ready(affine(x2, w2, b2))                        # 2-step row grid
    out2b = jax.block_until_ready(affine(x2, w2, b2, block_bytes=64 << 10))  # ragged row grid
    assert jnp.allclose(out2a, ref2, atol=1e-6, rtol=1e-6)
    assert jnp.allclose(out2b, ref2, atol=1e-6, rtol=1e-6)

    # --- Third check: force the 2-D (rows, lane) grid with a tiny block budget
    #     (emulates the wide-dim split path that protects the v7x VMEM budget). ---
    k4, k5, k6 = jax.random.split(jax.random.PRNGKey(2), 3)
    dim3 = 512
    x3 = jax.random.normal(k4, (8, 8, dim3), dtype=jnp.float32)     # rows=64
    w3 = jax.random.normal(k5, (dim3,), dtype=jnp.float32)
    b3 = jax.random.normal(k6, (dim3,), dtype=jnp.float32)
    out3 = jax.block_until_ready(affine(x3, w3, b3, block_bytes=8 << 10))    # grid (8, 2)
    ref3 = x3 * w3 + b3
    assert jnp.allclose(out3, ref3, atol=1e-6, rtol=1e-6)

    print("KERNEL_OK")
</pallas_src>

<mosaic_0001>
module attributes {stable_mosaic.version = 11 : i64} {
  func.func @_affine_kernel(%arg0: i32, %arg1: i32, %arg2: memref<4x128xf32, #tpu.memory_space<vmem>>, %arg3: memref<1x128xf32, #tpu.memory_space<vmem>>, %arg4: memref<1x128xf32, #tpu.memory_space<vmem>>, %arg5: memref<4x128xf32, #tpu.memory_space<vmem>>) attributes {dimension_semantics = [#tpu.dimension_semantics<parallel>, #tpu.dimension_semantics<parallel>], iteration_bounds = array<i64: 1, 1>, scalar_prefetch = 0 : i64, scratch_operands = 0 : i64, tpu.core_type = #tpu.core_type<tc>, window_params = [{transform_indices = @transform_0, window_bounds = array<i64: 4, 128>}, {transform_indices = @transform_1, window_bounds = array<i64: 1, 128>}, {transform_indices = @transform_2, window_bounds = array<i64: 1, 128>}, {transform_indices = @transform_3, window_bounds = array<i64: 4, 128>}]} {
    %c0 = arith.constant 0 : index
    %c0_0 = arith.constant 0 : index
    %0 = vector.load %arg2[%c0, %c0_0] : memref<4x128xf32, #tpu.memory_space<vmem>>, vector<4x128xf32>
    %c0_1 = arith.constant 0 : index
    %c0_2 = arith.constant 0 : index
    %1 = vector.load %arg3[%c0_1, %c0_2] : memref<1x128xf32, #tpu.memory_space<vmem>>, vector<1x128xf32>
    %2 = vector.broadcast %1 : vector<1x128xf32> to vector<4x128xf32>
    %3 = arith.mulf %0, %2 : vector<4x128xf32>
    %c0_3 = arith.constant 0 : index
    %c0_4 = arith.constant 0 : index
    %4 = vector.load %arg4[%c0_3, %c0_4] : memref<1x128xf32, #tpu.memory_space<vmem>>, vector<1x128xf32>
    %5 = vector.broadcast %4 : vector<1x128xf32> to vector<4x128xf32>
    %6 = arith.addf %3, %5 : vector<4x128xf32>
    %c0_5 = arith.constant 0 : index
    %c0_6 = arith.constant 0 : index
    %7 = vector.load %arg5[%c0_5, %c0_6] : memref<4x128xf32, #tpu.memory_space<vmem>>, vector<4x128xf32>
    tpu.vector_store %arg5[%c0_5, %c0_6], %6 {strides = array<i32>} : memref<4x128xf32, #tpu.memory_space<vmem>>, vector<4x128xf32>,
    return
  }
  func.func @transform_0(%arg0: i32, %arg1: i32) -> (i32, i32) {
    %c0_i32 = arith.constant 0 : i32
    return %arg0, %arg1 : i32, i32
  }
  func.func @transform_1(%arg0: i32, %arg1: i32) -> (i32, i32) {
    %c0_i32 = arith.constant 0 : i32
    %c0_i32_0 = arith.constant 0 : i32
    return %c0_i32, %arg1 : i32, i32
  }
  func.func @transform_2(%arg0: i32, %arg1: i32) -> (i32, i32) {
    %c0_i32 = arith.constant 0 : i32
    %c0_i32_0 = arith.constant 0 : i32
    return %c0_i32, %arg1 : i32, i32
  }
  func.func @transform_3(%arg0: i32, %arg1: i32) -> (i32, i32) {
    %c0_i32 = arith.constant 0 : i32
    return %arg0, %arg1 : i32, i32
  }
}

</mosaic_0001>

<llo_original>
// kernel: tpu_custom_call.1
$region0: #{tpu_custom_call.1}
  #allocation0 [shape = 'u32[]', space=smem, size = 0x4, offset = 0x4, fixed_abs, tag = 'smem constant byte address 0x4 - core index']
  #allocation1 [shape = 'u32[144,128]{1,0:T(1,128)}', space=vmem, size = 0x12000, scoped, tag = 'internal scratch']
  %s0 = inlined_call_operand.hbm [shape: f32[4,128], index: 0, kind: input, shape index: {}]
  %s1 = inlined_call_operand.vmem [shape: f32[1,128], index: 1, kind: input, shape index: {}]
  %s2 = inlined_call_operand.vmem [shape: f32[1,128], index: 2, kind: input, shape index: {}]
  %s3 = inlined_call_operand.hbm [shape: f32[4,128], index: 3, kind: output, shape index: {}]
  %s4 = sld [smem:[#allocation0]]
  $region26: #{tpu_custom_call.1} parent=0
    _
  %s6 = ssub.s32 1, %s4
  %s7 = scalar_select 0, %s6, %s4
  $region1: #{tpu_custom_call.1} parent=0
    #allocation2 [shape = 'u8[2048]{0}', space=vmem, size = 0x800, scoped, tag = 'input window, operand 0, single buffered']
    #allocation3 [shape = 's32[1]{0}', space=sflag, size = 0x4, scoped, tag = 'scoped memory for tpu_custom_call.1']
    #allocation4 [shape = 's32[1]{0}', space=sflag, size = 0x4, scoped, tag = 'scoped memory for tpu_custom_call.1']
    #allocation5 [shape = 'u8[2048]{0}', space=vmem, size = 0x800, scoped, tag = 'output window, operand 0, single buffered']
    %8 = vsyncpa [#allocation3], 0
    %9 = vsyncpa [#allocation4], 0
    // Predicated region
    $region2: #{tpu_custom_call.1} parent=1 // pred_check
      _
    $region3: #{tpu_custom_call.1} parent=1 // pred_check_branch
      %11 = sbr.rel (0) target = $region5
    $region4: #{tpu_custom_call.1} parent=1 // pred_region
      %s13 = ssub.s32 64, 64
      %14 = vsyncadd [#allocation3], %s13
      %s16 = sshll.u32 [#allocation2], 4
      %s17 = int_to_ptr.vmem [resolvable:$true] %s16
      %19 = dma.hbm_to_vmem [thread:$0]  %s0, 64, %s17, [#allocation3]
    $region5: #{tpu_custom_call.1} parent=1 // pred_fallthru
      _
    // Predicated region
    $region6: #{tpu_custom_call.1} parent=1 // pred_check
      _
    $region7: #{tpu_custom_call.1} parent=1 // pred_check_branch
      %21 = sbr.rel (0) target = $region9
    $region8: #{tpu_custom_call.1} parent=1 // pred_region
      _
    $region9: #{tpu_custom_call.1} parent=1 // pred_fallthru
      _
    // Predicated region
    $region10: #{tpu_custom_call.1} parent=1 // pred_check
      _
    $region11: #{tpu_custom_call.1} parent=1 // pred_check_branch
      %23 = sbr.rel (0) target = $region13
    $region12: #{tpu_custom_call.1} parent=1 // pred_region
      _
    $region13: #{tpu_custom_call.1} parent=1 // pred_fallthru
      _
    // Predicated region
    $region14: #{tpu_custom_call.1} parent=1 // pred_check
      _
    $region15: #{tpu_custom_call.1} parent=1 // pred_check_branch
      %25 = sbr.rel (0) target = $region17
    $region16: #{tpu_custom_call.1} parent=1 // pred_region
      %26 = dma.done [#allocation3], 64
    $region17: #{tpu_custom_call.1} parent=1 // pred_fallthru
      _
    %v27 = vld [vmem:[#allocation2] sm:$0xf]
    %v28 = vld [vmem:[%s1] sm:$0x1]
    %v30 = vlaneseq
    %v31 = vshrl.u32 %v30, 7
    %v32 = vsub.s32 0, %v31
    %v33 = vrot.slane %v28, %v32
    %v35 = vmul.f32 %v27, %v33
    %v36 = vld [vmem:[%s2] sm:$0x1]
    %v38 = vlaneseq
    %v39 = vshrl.u32 %v38, 7
    %v40 = vsub.s32 0, %v39
    %v41 = vrot.slane %v36, %v40
    %v43 = vadd.f32 %v35, %v41
    %44 = vst [vmem:[#allocation5] sm:$0xf] %v43
    // Predicated region
    $region18: #{tpu_custom_call.1} parent=1 // pred_check
      _
    $region19: #{tpu_custom_call.1} parent=1 // pred_check_branch
      %46 = sbr.rel (0) target = $region21
    $region20: #{tpu_custom_call.1} parent=1 // pred_region
      %s48 = ssub.s32 64, 64
      %49 = vsyncadd [#allocation4], %s48
      %s51 = sshll.u32 [#allocation5], 4
      %s52 = int_to_ptr.vmem [resolvable:$true] %s51
      %54 = dma.vmem_to_hbm [thread:$0]  %s52, 64, %s3, [#allocation4]
    $region21: #{tpu_custom_call.1} parent=1 // pred_fallthru
      _
    // Predicated region
    $region22: #{tpu_custom_call.1} parent=1 // pred_check
      _
    $region23: #{tpu_custom_call.1} parent=1 // pred_check_branch
      %56 = sbr.rel (0) target = $region25
    $region24: #{tpu_custom_call.1} parent=1 // pred_region
      %57 = dma.done [#allocation4], 64
    $region25: #{tpu_custom_call.1} parent=1 // pred_fallthru
      _
    %58 = vsyncpa [#allocation3], 1
    %59 = vsyncpa [#allocation4], 1

</llo_original>
